<compile_context>
chip_gen: v5e
topology: v5e:2x2
jax: 0.10.0
libtpu: 0.0.40
codegen_flags: <defaults>
</compile_context>

<pallas_src>
import jax
import jax.numpy as jnp
from jax.experimental import pallas as pl
from jax.experimental.pallas import tpu as pltpu


def _round_up(x: int, m: int) -> int:
    return ((x + m - 1) // m) * m


def _cdiv(a: int, b: int) -> int:
    return (a + b - 1) // b


def _softplus_f32(o):
    # Matches torch.nn.Softplus(beta=1, threshold=20); the jnp.minimum clamp
    # also keeps exp() finite on masked garbage rows of ragged blocks.
    return jnp.where(o > 20.0, o, jnp.log1p(jnp.exp(jnp.minimum(o, 20.0))))


_CHUNK_ELEMS = 64 * 1024          # per-chunk elements -> ~256 KiB f32 temporaries
_INPUT_VMEM_BUDGET = 20 << 20     # double-buffered input tiles (all 3 arrays)
_VMEM_LIMIT = 32 << 20            # scoped VMEM limit, safe on v5e/v6e/v7x


def _num_tensorcores() -> int:
    """Best-effort: 2 TensorCores per chip only on v7x, else 1."""
    try:
        kind = jax.devices()[0].device_kind.lower()
    except Exception:
        return 1
    return 2 if ("v7" in kind or "tpu7" in kind) else 1


def _make_kernel(R: int, W: int, tb: int, chunk: int, bps: int, ragged: bool):
    num_chunks = tb // chunk

    def kernel(s1_ref, s2_ref, t_ref, out_ref, acc_ref):
        c = pl.program_id(0)
        i = pl.program_id(1)

        @pl.when(i == 0)
        def _():
            acc_ref[...] = jnp.zeros_like(acc_ref)

        # Logical (unclamped) first row of this tile; used for the ragged mask.
        row0 = (c * bps + i) * tb

        def accumulate(mask_rows: bool):
            def body(k, carry):
                r = pl.multiple_of(k * chunk, chunk)
                sl = pl.ds(r, chunk)
                # Upcast in-register; inputs stream in their native dtype.
                o = s1_ref[sl, :].astype(jnp.float32) - s2_ref[sl, :].astype(jnp.float32)
                tt = t_ref[sl, :].astype(jnp.float32)
                val = -tt * o + _softplus_f32(o)
                if mask_rows:
                    rows = row0 + r + jax.lax.broadcasted_iota(jnp.int32, (chunk, W), 0)
                    val = jnp.where(rows < R, val, 0.0)
                # Pure VPU vreg adds into the single-vreg accumulator; the
                # cross-lane reduce happens once, outside the kernel.
                acc_ref[...] += val.reshape(chunk // 8, 8, W // 128, 128).sum(axis=(0, 2))
                return carry

            jax.lax.fori_loop(0, num_chunks, body, 0, unroll=True)

        if ragged:
            # Gate the mask: only tiles that can contain out-of-bounds rows pay
            # the iota/compare/select cost.
            @pl.when(row0 + tb <= R)
            def _():
                accumulate(False)

            @pl.when(row0 + tb > R)
            def _():
                accumulate(True)
        else:
            accumulate(False)

        @pl.when(i == pl.num_programs(1) - 1)
        def _():
            out_ref[...] = acc_ref[...]   # lane-dense (8, 128) partial sum

    return kernel


def _pairwise_sum_2d(s1, s2, t, num_splits: int):
    """Sum of (-t*o + softplus(o)) over a 2-D lane-dense (R, W) slab."""
    R, W = s1.shape
    assert R >= 1 and W % 128 == 0

    # Rows per inner chunk: bounds f32 temporaries to ~_CHUNK_ELEMS elements.
    chunk = min(_round_up(R, 8), max(8, _round_up(_CHUNK_ELEMS // W, 8)))

    # Tile rows sized by bytes: double-buffered inputs stay within budget.
    bytes_per_row = W * (s1.dtype.itemsize + s2.dtype.itemsize + t.dtype.itemsize)
    tb = max(chunk, (_INPUT_VMEM_BUDGET // (2 * bytes_per_row)) // chunk * chunk)
    tb = min(tb, _round_up(R, chunk))

    nblocks = _cdiv(R, tb)
    num_splits = max(1, min(num_splits, nblocks))
    bps = _cdiv(nblocks, num_splits)
    ragged = (num_splits * bps * tb) != R

    kernel = _make_kernel(R, W, tb, chunk, bps, ragged)
    last_block = nblocks - 1

    def in_map(c, i):
        # Clamp so the DMA window always overlaps the array; blocks past the
        # end are fully zeroed by the in-kernel row mask (which uses the
        # unclamped logical row index).
        return (jnp.minimum(c * bps + i, last_block), 0)

    in_spec = pl.BlockSpec((tb, W), in_map)

    partials = pl.pallas_call(
        kernel,
        out_shape=jax.ShapeDtypeStruct((num_splits, 8, 128), jnp.float32),
        grid=(num_splits, bps),
        in_specs=[in_spec, in_spec, in_spec],
        out_specs=pl.BlockSpec((None, 8, 128), lambda c, i: (c, 0, 0)),
        scratch_shapes=[pltpu.VMEM((8, 128), jnp.float32)],
        compiler_params=pltpu.CompilerParams(
            dimension_semantics=("parallel", "arbitrary"),
            vmem_limit_bytes=_VMEM_LIMIT),
    )(s1, s2, t)

    return jnp.sum(partials)


def pairwise_loss(s1, s2, t, *, num_splits=None):
    """mean(-t * (s1 - s2) + softplus(s1 - s2)), accumulated in f32."""
    s1, s2, t = jnp.broadcast_arrays(s1, s2, t)
    total = s1.size
    if total == 0:
        return jnp.float32(jnp.nan)
    if num_splits is None:
        num_splits = _num_tensorcores()

    # Flatten (free for contiguous inputs) and re-view as a lane-dense slab.
    f1, f2, ft = s1.reshape(-1), s2.reshape(-1), t.reshape(-1)

    W = None
    for cand in (2048, 1024, 512, 256, 128):
        if total % cand == 0:
            W = cand
            break
    if W is None:
        W = 512
    main = (total // W) * W

    acc = jnp.float32(0.0)
    if main > 0:
        if main == total:
            m1, m2, mt = f1, f2, ft
        else:
            # Ragged flat length (not a multiple of 128): prefix slice
            # materializes a copy; only hit for awkward sizes.
            m1, m2, mt = f1[:main], f2[:main], ft[:main]
        acc = acc + _pairwise_sum_2d(m1.reshape(main // W, W),
                                     m2.reshape(main // W, W),
                                     mt.reshape(main // W, W),
                                     num_splits)
    if main < total:
        # Tiny tail (< W elements): plain jnp epilogue.
        o = f1[main:].astype(jnp.float32) - f2[main:].astype(jnp.float32)
        tt = ft[main:].astype(jnp.float32)
        acc = acc + jnp.sum(-tt * o + _softplus_f32(o))

    return acc / jnp.float32(total)


def pairwise_loss_ref(s1, s2, t):
    o = s1.astype(jnp.float32) - s2.astype(jnp.float32)
    tt = t.astype(jnp.float32)
    return jnp.mean(-tt * o + _softplus_f32(o))


if __name__ == "__main__":
    key = jax.random.PRNGKey(0)
    cases = [
        ((8, 128), jnp.float32),      # exact lane-dense tiling
        ((20, 96), jnp.float32),      # ragged row count -> gated mask path
        ((4, 8, 32), jnp.bfloat16),   # N-D input, bf16 streamed natively
        ((1024, 1024), jnp.float32),  # multiple grid steps / per-split reduce
    ]
    for idx, (shape, dtype) in enumerate(cases):
        k1, k2, k3 = jax.random.split(jax.random.fold_in(key, idx), 3)
        s1 = jax.random.normal(k1, shape, dtype=jnp.float32).astype(dtype)
        s2 = jax.random.normal(k2, shape, dtype=jnp.float32).astype(dtype)
        t = jax.random.bernoulli(k3, p=0.5, shape=shape).astype(dtype)

        loss = jax.block_until_ready(pairwise_loss(s1, s2, t))
        ref = jax.block_until_ready(pairwise_loss_ref(s1, s2, t))
        assert jnp.allclose(loss, ref, rtol=1e-4, atol=1e-5), (shape, dtype, loss, ref)

    print("KERNEL_OK")
</pallas_src>

<mosaic_0001>
module attributes {stable_mosaic.version = 11 : i64} {
  func.func @kernel(%arg0: i32, %arg1: i32, %arg2: memref<8x1024xf32, #tpu.memory_space<vmem>>, %arg3: memref<8x1024xf32, #tpu.memory_space<vmem>>, %arg4: memref<8x1024xf32, #tpu.memory_space<vmem>>, %arg5: memref<1x8x128xf32, #tpu.memory_space<vmem>>, %arg6: memref<8x128xf32, #tpu.memory_space<vmem>>) attributes {dimension_semantics = [#tpu.dimension_semantics<parallel>, #tpu.dimension_semantics<arbitrary>], iteration_bounds = array<i64: 1, 1>, scalar_prefetch = 0 : i64, scratch_operands = 1 : i64, tpu.core_type = #tpu.core_type<tc>, window_params = [{transform_indices = @transform_0, window_bounds = array<i64: 8, 1024>}, {transform_indices = @transform_1, window_bounds = array<i64: 8, 1024>}, {transform_indices = @transform_2, window_bounds = array<i64: 8, 1024>}, {transform_indices = @transform_3, window_bounds = array<i64: 1, 8, 128>}]} {
    %c0_i32 = arith.constant 0 : i32
    %0 = arith.cmpi eq, %arg1, %c0_i32 : i32
    %1 = arith.extui %0 : i1 to i32
    %c0_i32_0 = arith.constant 0 : i32
    %2 = arith.cmpi ne, %1, %c0_i32_0 : i32
    scf.if %2 {
      %cst = arith.constant 0.000000e+00 : f32
      %17 = vector.broadcast %cst : f32 to vector<8x128xf32>
      %c0 = arith.constant 0 : index
      %c0_9 = arith.constant 0 : index
      %18 = vector.load %arg6[%c0, %c0_9] : memref<8x128xf32, #tpu.memory_space<vmem>>, vector<8x128xf32>
      tpu.vector_store %arg6[%c0, %c0_9], %17 {strides = array<i32>} : memref<8x128xf32, #tpu.memory_space<vmem>>, vector<8x128xf32>,
    } else {
    }
    %c1_i32 = arith.constant 1 : i32
    %3 = arith.muli %arg0, %c1_i32 : i32
    %4 = arith.addi %3, %arg1 : i32
    %c8_i32 = arith.constant 8 : i32
    %5 = arith.muli %4, %c8_i32 : i32
    %c8_i32_1 = arith.constant 8 : i32
    %6 = arith.addi %5, %c8_i32_1 : i32
    %c1_i32_2 = arith.constant 1 : i32
    %7 = arith.cmpi sle, %6, %c1_i32_2 : i32
    %8 = arith.extui %7 : i1 to i32
    %c0_i32_3 = arith.constant 0 : i32
    %9 = arith.cmpi ne, %8, %c0_i32_3 : i32
    scf.if %9 {
      %c0_i32_9 = arith.constant 0 : i32
      %c8_i32_10 = arith.constant 8 : i32
      %17 = arith.muli %c0_i32_9, %c8_i32_10 : i32
      %18 = tpu.assume_multiple %17, 8 : i32
      %19 = arith.index_cast %18 : i32 to index
      %c0 = arith.constant 0 : index
      %20 = vector.load %arg2[%19, %c0] : memref<8x1024xf32, #tpu.memory_space<vmem>>, vector<8x1024xf32>
      %21 = arith.index_cast %18 : i32 to index
      %c0_11 = arith.constant 0 : index
      %22 = vector.load %arg3[%21, %c0_11] : memref<8x1024xf32, #tpu.memory_space<vmem>>, vector<8x1024xf32>
      %23 = arith.subf %20, %22 : vector<8x1024xf32>
      %24 = arith.index_cast %18 : i32 to index
      %c0_12 = arith.constant 0 : index
      %25 = vector.load %arg4[%24, %c0_12] : memref<8x1024xf32, #tpu.memory_space<vmem>>, vector<8x1024xf32>
      %cst = arith.constant 0.000000e+00 : f32
      %26 = vector.broadcast %cst : f32 to vector<8x1024xf32>
      %27 = arith.subf %26, %25 : vector<8x1024xf32>
      %28 = arith.mulf %27, %23 : vector<8x1024xf32>
      %cst_13 = arith.constant 2.000000e+01 : f32
      %29 = vector.broadcast %cst_13 : f32 to vector<8x1024xf32>
      %30 = arith.cmpf ogt, %23, %29 : vector<8x1024xf32>
      %cst_14 = arith.constant 2.000000e+01 : f32
      %31 = vector.broadcast %cst_14 : f32 to vector<8x1024xf32>
      %32 = arith.minimumf %23, %31 : vector<8x1024xf32>
      %33 = math.exp %32 : vector<8x1024xf32>
      %34 = math.log1p %33 : vector<8x1024xf32>
      %35 = arith.select %30, %23, %34 : vector<8x1024xi1>, vector<8x1024xf32>
      %36 = arith.addf %28, %35 : vector<8x1024xf32>
      %c0_15 = arith.constant 0 : index
      %c0_16 = arith.constant 0 : index
      %37 = vector.load %arg6[%c0_15, %c0_16] : memref<8x128xf32, #tpu.memory_space<vmem>>, vector<8x128xf32>
      %38 = vector.shape_cast %36 : vector<8x1024xf32> to vector<1x8x8x128xf32>
      %cst_17 = arith.constant dense<0.000000e+00> : vector<8x128xf32>
      %39 = vector.multi_reduction <add>, %38, %cst_17 [0, 2] : vector<1x8x8x128xf32> to vector<8x128xf32>
      %40 = arith.addf %37, %39 : vector<8x128xf32>
      %c0_18 = arith.constant 0 : index
      %c0_19 = arith.constant 0 : index
      %41 = vector.load %arg6[%c0_18, %c0_19] : memref<8x128xf32, #tpu.memory_space<vmem>>, vector<8x128xf32>
      tpu.vector_store %arg6[%c0_18, %c0_19], %40 {strides = array<i32>} : memref<8x128xf32, #tpu.memory_space<vmem>>, vector<8x128xf32>,
      %c1_i32_20 = arith.constant 1 : i32
    } else {
    }
    %c8_i32_4 = arith.constant 8 : i32
    %10 = arith.addi %5, %c8_i32_4 : i32
    %c1_i32_5 = arith.constant 1 : i32
    %11 = arith.cmpi sgt, %10, %c1_i32_5 : i32
    %12 = arith.extui %11 : i1 to i32
    %c0_i32_6 = arith.constant 0 : i32
    %13 = arith.cmpi ne, %12, %c0_i32_6 : i32
    scf.if %13 {
      %c0_i32_9 = arith.constant 0 : i32
      %c8_i32_10 = arith.constant 8 : i32
      %17 = arith.muli %c0_i32_9, %c8_i32_10 : i32
      %18 = tpu.assume_multiple %17, 8 : i32
      %19 = arith.index_cast %18 : i32 to index
      %c0 = arith.constant 0 : index
      %20 = vector.load %arg2[%19, %c0] : memref<8x1024xf32, #tpu.memory_space<vmem>>, vector<8x1024xf32>
      %21 = arith.index_cast %18 : i32 to index
      %c0_11 = arith.constant 0 : index
      %22 = vector.load %arg3[%21, %c0_11] : memref<8x1024xf32, #tpu.memory_space<vmem>>, vector<8x1024xf32>
      %23 = arith.subf %20, %22 : vector<8x1024xf32>
      %24 = arith.index_cast %18 : i32 to index
      %c0_12 = arith.constant 0 : index
      %25 = vector.load %arg4[%24, %c0_12] : memref<8x1024xf32, #tpu.memory_space<vmem>>, vector<8x1024xf32>
      %cst = arith.constant 0.000000e+00 : f32
      %26 = vector.broadcast %cst : f32 to vector<8x1024xf32>
      %27 = arith.subf %26, %25 : vector<8x1024xf32>
      %28 = arith.mulf %27, %23 : vector<8x1024xf32>
      %cst_13 = arith.constant 2.000000e+01 : f32
      %29 = vector.broadcast %cst_13 : f32 to vector<8x1024xf32>
      %30 = arith.cmpf ogt, %23, %29 : vector<8x1024xf32>
      %cst_14 = arith.constant 2.000000e+01 : f32
      %31 = vector.broadcast %cst_14 : f32 to vector<8x1024xf32>
      %32 = arith.minimumf %23, %31 : vector<8x1024xf32>
      %33 = math.exp %32 : vector<8x1024xf32>
      %34 = math.log1p %33 : vector<8x1024xf32>
      %35 = arith.select %30, %23, %34 : vector<8x1024xi1>, vector<8x1024xf32>
      %36 = arith.addf %28, %35 : vector<8x1024xf32>
      %37 = arith.addi %5, %18 : i32
      %38 = tpu.iota {dimensions = array<i32: 0>} : vector<8x1024xi32>
      %39 = vector.broadcast %37 : i32 to vector<8x1024xi32>
      %40 = arith.addi %39, %38 : vector<8x1024xi32>
      %c1_i32_15 = arith.constant 1 : i32
      %41 = vector.broadcast %c1_i32_15 : i32 to vector<8x1024xi32>
      %42 = arith.cmpi slt, %40, %41 : vector<8x1024xi32>
      %cst_16 = arith.constant 0.000000e+00 : f32
      %43 = vector.broadcast %cst_16 : f32 to vector<8x1024xf32>
      %44 = arith.select %42, %36, %43 : vector<8x1024xi1>, vector<8x1024xf32>
      %c0_17 = arith.constant 0 : index
      %c0_18 = arith.constant 0 : index
      %45 = vector.load %arg6[%c0_17, %c0_18] : memref<8x128xf32, #tpu.memory_space<vmem>>, vector<8x128xf32>
      %46 = vector.shape_cast %44 : vector<8x1024xf32> to vector<1x8x8x128xf32>
      %cst_19 = arith.constant dense<0.000000e+00> : vector<8x128xf32>
      %47 = vector.multi_reduction <add>, %46, %cst_19 [0, 2] : vector<1x8x8x128xf32> to vector<8x128xf32>
      %48 = arith.addf %45, %47 : vector<8x128xf32>
      %c0_20 = arith.constant 0 : index
      %c0_21 = arith.constant 0 : index
      %49 = vector.load %arg6[%c0_20, %c0_21] : memref<8x128xf32, #tpu.memory_space<vmem>>, vector<8x128xf32>
      tpu.vector_store %arg6[%c0_20, %c0_21], %48 {strides = array<i32>} : memref<8x128xf32, #tpu.memory_space<vmem>>, vector<8x128xf32>,
      %c1_i32_22 = arith.constant 1 : i32
    } else {
    }
    %c0_i32_7 = arith.constant 0 : i32
    %14 = arith.cmpi eq, %arg1, %c0_i32_7 : i32
    %15 = arith.extui %14 : i1 to i32
    %c0_i32_8 = arith.constant 0 : i32
    %16 = arith.cmpi ne, %15, %c0_i32_8 : i32
    scf.if %16 {
      %c0 = arith.constant 0 : index
      %c0_9 = arith.constant 0 : index
      %17 = vector.load %arg6[%c0, %c0_9] : memref<8x128xf32, #tpu.memory_space<vmem>>, vector<8x128xf32>
      %c0_10 = arith.constant 0 : index
      %c0_11 = arith.constant 0 : index
      %c0_12 = arith.constant 0 : index
      %18 = vector.load %arg5[%c0_10, %c0_11, %c0_12] : memref<1x8x128xf32, #tpu.memory_space<vmem>>, vector<1x8x128xf32>
      %19 = vector.shape_cast %18 : vector<1x8x128xf32> to vector<8x128xf32>
      %20 = vector.shape_cast %17 : vector<8x128xf32> to vector<1x8x128xf32>
      tpu.vector_store %arg5[%c0_10, %c0_11, %c0_12], %20 {strides = array<i32>} : memref<1x8x128xf32, #tpu.memory_space<vmem>>, vector<1x8x128xf32>,
    } else {
    }
    return
  }
  func.func @transform_0(%arg0: i32, %arg1: i32) -> (i32, i32) {
    %c1_i32 = arith.constant 1 : i32
    %0 = arith.muli %arg0, %c1_i32 : i32
    %1 = arith.addi %0, %arg1 : i32
    %c0_i32 = arith.constant 0 : i32
    %2 = arith.minsi %1, %c0_i32 : i32
    %c0_i32_0 = arith.constant 0 : i32
    %c0_i32_1 = arith.constant 0 : i32
    return %2, %c0_i32_0 : i32, i32
  }
  func.func @transform_1(%arg0: i32, %arg1: i32) -> (i32, i32) {
    %c1_i32 = arith.constant 1 : i32
    %0 = arith.muli %arg0, %c1_i32 : i32
    %1 = arith.addi %0, %arg1 : i32
    %c0_i32 = arith.constant 0 : i32
    %2 = arith.minsi %1, %c0_i32 : i32
    %c0_i32_0 = arith.constant 0 : i32
    %c0_i32_1 = arith.constant 0 : i32
    return %2, %c0_i32_0 : i32, i32
  }
  func.func @transform_2(%arg0: i32, %arg1: i32) -> (i32, i32) {
    %c1_i32 = arith.constant 1 : i32
    %0 = arith.muli %arg0, %c1_i32 : i32
    %1 = arith.addi %0, %arg1 : i32
    %c0_i32 = arith.constant 0 : i32
    %2 = arith.minsi %1, %c0_i32 : i32
    %c0_i32_0 = arith.constant 0 : i32
    %c0_i32_1 = arith.constant 0 : i32
    return %2, %c0_i32_0 : i32, i32
  }
  func.func @transform_3(%arg0: i32, %arg1: i32) -> (i32, i32, i32) {
    %c0_i32 = arith.constant 0 : i32
    %c0_i32_0 = arith.constant 0 : i32
    %c0_i32_1 = arith.constant 0 : i32
    return %arg0, %c0_i32, %c0_i32_0 : i32, i32, i32
  }
}

</mosaic_0001>

<llo_original>
// kernel: tpu_custom_call.1
$region0: #{tpu_custom_call.1}
  #allocation0 [shape = 'u32[]', space=smem, size = 0x4, offset = 0x4, fixed_abs, tag = 'smem constant byte address 0x4 - core index']
  #allocation1 [shape = 'u32[72,128]{1,0:T(1,128)}', space=vmem, size = 0x9000, scoped, tag = 'internal scratch']
  #allocation2 [shape = 'f32[8,128]{1,0:T(8,128)}', space=vmem, size = 0x1000, scoped, tag = 'scratch operand']
  %s0 = inlined_call_operand.hbm [shape: f32[1,1024], index: 0, kind: input, shape index: {}]
  %s1 = inlined_call_operand.hbm [shape: f32[1,1024], index: 1, kind: input, shape index: {}]
  %s2 = inlined_call_operand.hbm [shape: f32[1,1024], index: 2, kind: input, shape index: {}]
  %s3 = inlined_call_operand.hbm [shape: f32[1,8,128], index: 3, kind: output, shape index: {}]
  %s4 = sld [smem:[#allocation0]]
  $region50: #{tpu_custom_call.1} parent=0
    _
  %s6 = ssub.s32 1, %s4
  %s7 = scalar_select 0, %s6, %s4
  $region1: #{tpu_custom_call.1} parent=0
    #allocation3 [shape = 'u8[32768]{0}', space=vmem, size = 0x8000, scoped, tag = 'input window, operand 0, single buffered']
    #allocation4 [shape = 's32[1]{0}', space=sflag, size = 0x4, scoped, tag = 'scoped memory for tpu_custom_call.1']
    #allocation5 [shape = 's32[1]{0}', space=sflag, size = 0x4, scoped, tag = 'scoped memory for tpu_custom_call.1']
    #allocation6 [shape = 'u8[32768]{0}', space=vmem, size = 0x8000, scoped, tag = 'input window, operand 1, single buffered']
    #allocation7 [shape = 's32[1]{0}', space=sflag, size = 0x4, scoped, tag = 'scoped memory for tpu_custom_call.1']
    #allocation8 [shape = 'u8[32768]{0}', space=vmem, size = 0x8000, scoped, tag = 'input window, operand 2, single buffered']
    #allocation9 [shape = 'u8[4096]{0}', space=vmem, size = 0x1000, scoped, tag = 'output window, operand 0, single buffered']
    %8 = vsyncpa [#allocation4], 0
    %9 = vsyncpa [#allocation7], 0
    %10 = vsyncpa [#allocation5], 0
    // Predicated region
    $region2: #{tpu_custom_call.1} parent=1 // pred_check
      _
    $region3: #{tpu_custom_call.1} parent=1 // pred_check_branch
      %12 = sbr.rel (0) target = $region5
    $region4: #{tpu_custom_call.1} parent=1 // pred_region
      %s13 = sadd.s32 0, 0
      %p14 = scmp.lt.s32.totalorder %s13, 0
      %s15 = scalar_select %p14, %s13, 0
      %s16 = smul.u32 8, %s15
      %s17 = ssub.s32 1, %s16
      %s18 = smul.u32 %s17, 8
      %s19 = ssub.s32 64, %s18
      %s20 = sshll.u32 %s19, 4
      %21 = vsyncadd [#allocation4], %s20
      %p22 = scmp.ne.s32.totalorder 0, %s18
      %s23 = smul.addr %s16, 8
      %s24 = scalar_lea.hbm %s0, %s23
      %s25 = smul.u32 8, %s17
      %s26 = sshll.u32 %s24, 4
      %s27 = int_to_ptr.hbm [resolvable:$true] %s26
      %s28 = sshll.u32 [#allocation3], 4
      %s29 = int_to_ptr.vmem [resolvable:$true] %s28
      %s30 = sshll.u32 %s25, 4
      %34 = dma.hbm_to_vmem [thread:$0]  (%p22), %s27, %s30, %s29, [#allocation4], 128, 128, 8
    $region5: #{tpu_custom_call.1} parent=1 // pred_fallthru
      _
    // Predicated region
    $region6: #{tpu_custom_call.1} parent=1 // pred_check
      _
    $region7: #{tpu_custom_call.1} parent=1 // pred_check_branch
      %36 = sbr.rel (0) target = $region9
    $region8: #{tpu_custom_call.1} parent=1 // pred_region
      %s37 = sadd.s32 0, 0
      %p38 = scmp.lt.s32.totalorder %s37, 0
      %s39 = scalar_select %p38, %s37, 0
      %s40 = smul.u32 8, %s39
      %s41 = ssub.s32 1, %s40
      %s42 = smul.u32 %s41, 8
      %s43 = ssub.s32 64, %s42
      %s44 = sshll.u32 %s43, 4
      %45 = vsyncadd [#allocation7], %s44
      %p46 = scmp.ne.s32.totalorder 0, %s42
      %s47 = smul.addr %s40, 8
      %s48 = scalar_lea.hbm %s1, %s47
      %s49 = smul.u32 8, %s41
      %s50 = sshll.u32 %s48, 4
      %s51 = int_to_ptr.hbm [resolvable:$true] %s50
      %s52 = sshll.u32 [#allocation6], 4
      %s53 = int_to_ptr.vmem [resolvable:$true] %s52
      %s54 = sshll.u32 %s49, 4
      %58 = dma.hbm_to_vmem [thread:$0]  (%p46), %s51, %s54, %s53, [#allocation7], 128, 128, 8
    $region9: #{tpu_custom_call.1} parent=1 // pred_fallthru
      _
    // Predicated region
    $region10: #{tpu_custom_call.1} parent=1 // pred_check
      _
    $region11: #{tpu_custom_call.1} parent=1 // pred_check_branch
      %60 = sbr.rel (0) target = $region13
    $region12: #{tpu_custom_call.1} parent=1 // pred_region
      %s61 = sadd.s32 0, 0
      %p62 = scmp.lt.s32.totalorder %s61, 0
      %s63 = scalar_select %p62, %s61, 0
      %s64 = smul.u32 8, %s63
      %s65 = ssub.s32 1, %s64
      %s66 = smul.u32 %s65, 8
      %s67 = ssub.s32 64, %s66
      %s68 = sshll.u32 %s67, 4
      %69 = vsyncadd [#allocation7], %s68
      %p70 = scmp.ne.s32.totalorder 0, %s66
      %s71 = smul.addr %s64, 8
      %s72 = scalar_lea.hbm %s2, %s71
      %s73 = smul.u32 8, %s65
      %s74 = sshll.u32 %s72, 4
      %s75 = int_to_ptr.hbm [resolvable:$true] %s74
      %s76 = sshll.u32 [#allocation8], 4
      %s77 = int_to_ptr.vmem [resolvable:$true] %s76
      %s78 = sshll.u32 %s73, 4
      %82 = dma.hbm_to_vmem [thread:$0]  (%p70), %s75, %s78, %s77, [#allocation7], 128, 128, 8
    $region13: #{tpu_custom_call.1} parent=1 // pred_fallthru
      _
    // Predicated region
    $region14: #{tpu_custom_call.1} parent=1 // pred_check
      _
    $region15: #{tpu_custom_call.1} parent=1 // pred_check_branch
      %84 = sbr.rel (0) target = $region17
    $region16: #{tpu_custom_call.1} parent=1 // pred_region
      %86 = dma.done [#allocation4], 1024
    $region17: #{tpu_custom_call.1} parent=1 // pred_fallthru
      _
    // Predicated region
    $region18: #{tpu_custom_call.1} parent=1 // pred_check
      _
    $region19: #{tpu_custom_call.1} parent=1 // pred_check_branch
      %88 = sbr.rel (0) target = $region21
    $region20: #{tpu_custom_call.1} parent=1 // pred_region
      %90 = dma.done [#allocation7], 1024
    $region21: #{tpu_custom_call.1} parent=1 // pred_fallthru
      _
    // Predicated region
    $region22: #{tpu_custom_call.1} parent=1 // pred_check
      _
    $region23: #{tpu_custom_call.1} parent=1 // pred_check_branch
      %92 = sbr.rel (0) target = $region25
    $region24: #{tpu_custom_call.1} parent=1 // pred_region
      %94 = dma.done [#allocation7], 1024
    $region25: #{tpu_custom_call.1} parent=1 // pred_fallthru
      _
    %s95 = sadd.s32 0, 0
    %p96 = scmp.lt.s32.totalorder %s95, 0
    %s97 = scalar_select %p96, %s95, 0
    %s98 = smul.u32 8, %s97
    %s99 = ssub.s32 1, %s98
    %s100 = smul.u32 %s99, 8
    %s101 = sadd.s32 0, 0
    %p102 = scmp.lt.s32.totalorder %s101, 0
    %s103 = scalar_select %p102, %s101, 0
    %s104 = smul.u32 8, %s103
    %s105 = ssub.s32 1, %s104
    %s106 = smul.u32 %s105, 8
    %s107 = sadd.s32 0, 0
    %p108 = scmp.lt.s32.totalorder %s107, 0
    %s109 = scalar_select %p108, %s107, 0
    %s110 = smul.u32 8, %s109
    %s111 = ssub.s32 1, %s110
    %s112 = smul.u32 %s111, 8
    %p113 = scmp.eq.s32.totalorder 0, 0
    // Predicated region
    $region26: #{tpu_custom_call.1} parent=1 // pred_check
      %p114 = pneg %p113
    $region27: #{tpu_custom_call.1} parent=1 // pred_check_branch
      %116 = sbr.rel (%p114) target = $region29
    $region28: #{tpu_custom_call.1} parent=1 // pred_region
      %117 = vst [vmem:[#allocation2] sm:$0xff] 0.0
    $region29: #{tpu_custom_call.1} parent=1 // pred_fallthru
      _
    %s118 = sadd.s32 0, 0
    %s119 = smul.u32 %s118, 8
    %s120 = sadd.s32 %s119, 8
    %p121 = scmp.le.s32.totalorder %s120, 1
    // Predicated region
    $region30: #{tpu_custom_call.1} parent=1 // pred_check
      %p122 = pneg %p121
    $region31: #{tpu_custom_call.1} parent=1 // pred_check_branch
      %124 = sbr.rel (%p122) target = $region33
    $region32: #{tpu_custom_call.1} parent=1 // pred_region
      %s125 = smul.u32 0, 8
      %s126 = scalar_lea.vmem [#allocation3], %s125
      %v127 = vld [vmem:[%s126] sm:$0xff]
      %v128 = vld [vmem:[%s126 + $0x8] sm:$0xff]
      %v129 = vld [vmem:[%s126 + $0x10] sm:$0xff]
      %v130 = vld [vmem:[%s126 + $0x18] sm:$0xff]
      %v131 = vld [vmem:[%s126 + $0x20] sm:$0xff]
      %v132 = vld [vmem:[%s126 + $0x28] sm:$0xff]
      %v133 = vld [vmem:[%s126 + $0x30] sm:$0xff]
      %v134 = vld [vmem:[%s126 + $0x38] sm:$0xff]
      %s135 = scalar_lea.vmem [#allocation6], %s125
      %v136 = vld [vmem:[%s135] sm:$0xff]
      %v137 = vld [vmem:[%s135 + $0x8] sm:$0xff]
      %v138 = vld [vmem:[%s135 + $0x10] sm:$0xff]
      %v139 = vld [vmem:[%s135 + $0x18] sm:$0xff]
      %v140 = vld [vmem:[%s135 + $0x20] sm:$0xff]
      %v141 = vld [vmem:[%s135 + $0x28] sm:$0xff]
      %v142 = vld [vmem:[%s135 + $0x30] sm:$0xff]
      %v143 = vld [vmem:[%s135 + $0x38] sm:$0xff]
      %v144 = vsub.f32 %v127, %v136
      %v145 = vsub.f32 %v128, %v137
      %v146 = vsub.f32 %v129, %v138
      %v147 = vsub.f32 %v130, %v139
      %v148 = vsub.f32 %v131, %v140
      %v149 = vsub.f32 %v132, %v141
      %v150 = vsub.f32 %v133, %v142
      %v151 = vsub.f32 %v134, %v143
      %s152 = scalar_lea.vmem [#allocation8], %s125
      %v153 = vld [vmem:[%s152] sm:$0xff]
      %v154 = vld [vmem:[%s152 + $0x8] sm:$0xff]
      %v155 = vld [vmem:[%s152 + $0x10] sm:$0xff]
      %v156 = vld [vmem:[%s152 + $0x18] sm:$0xff]
      %v157 = vld [vmem:[%s152 + $0x20] sm:$0xff]
      %v158 = vld [vmem:[%s152 + $0x28] sm:$0xff]
      %v159 = vld [vmem:[%s152 + $0x30] sm:$0xff]
      %v160 = vld [vmem:[%s152 + $0x38] sm:$0xff]
      %v161 = vsub.f32 0.0, %v153
      %v162 = vsub.f32 0.0, %v154
      %v163 = vsub.f32 0.0, %v155
      %v164 = vsub.f32 0.0, %v156
      %v165 = vsub.f32 0.0, %v157
      %v166 = vsub.f32 0.0, %v158
      %v167 = vsub.f32 0.0, %v159
      %v168 = vsub.f32 0.0, %v160
      %v169 = vmul.f32 %v161, %v144
      %v170 = vmul.f32 %v162, %v145
      %v171 = vmul.f32 %v163, %v146
      %v172 = vmul.f32 %v164, %v147
      %v173 = vmul.f32 %v165, %v148
      %v174 = vmul.f32 %v166, %v149
      %v175 = vmul.f32 %v167, %v150
      %v176 = vmul.f32 %v168, %v151
      %vm177 = vcmp.gt.f32.partialorder %v144, 20.0
      %vm178 = vcmp.gt.f32.partialorder %v145, 20.0
      %vm179 = vcmp.gt.f32.partialorder %v146, 20.0
      %vm180 = vcmp.gt.f32.partialorder %v147, 20.0
      %vm181 = vcmp.gt.f32.partialorder %v148, 20.0
      %vm182 = vcmp.gt.f32.partialorder %v149, 20.0
      %vm183 = vcmp.gt.f32.partialorder %v150, 20.0
      %vm184 = vcmp.gt.f32.partialorder %v151, 20.0
      %v185 = vmin.f32 %v144, 20.0
      %v186 = vmin.f32 %v145, 20.0
      %v187 = vmin.f32 %v146, 20.0
      %v188 = vmin.f32 %v147, 20.0
      %v189 = vmin.f32 %v148, 20.0
      %v190 = vmin.f32 %v149, 20.0
      %v191 = vmin.f32 %v150, 20.0
      %v192 = vmin.f32 %v151, 20.0
      %v193 = vmul.f32 %v185, 1.442695
      %v194 = vpow.pop %v193
      %v195 = vmul.f32 %v186, 1.442695
      %v196 = vpow.pop %v195
      %v197 = vmul.f32 %v187, 1.442695
      %v198 = vpow.pop %v197
      %v199 = vmul.f32 %v188, 1.442695
      %v200 = vpow.pop %v199
      %v201 = vmul.f32 %v189, 1.442695
      %v202 = vpow.pop %v201
      %v203 = vmul.f32 %v190, 1.442695
      %v204 = vpow.pop %v203
      %v205 = vmul.f32 %v191, 1.442695
      %v206 = vpow.pop %v205
      %v207 = vmul.f32 %v192, 1.442695
      %v208 = vpow.pop %v207
      %v209 = vadd.f32 %v194, 1.0
      %v210 = vlog2.pop %v209
      %v211 = vmul.f32 %v210, 0.6931472
      %v212 = vmul.f32 -0.5, %v194
      %v213 = vadd.f32 %v212, 1.0
      %v214 = vmul.f32 %v213, %v194
      %v215 = vand.u32 2147483647, %v194
      %vm216 = vcmp.lt.f32.partialorder %v215, 0.0004427343
      %v217 = vsel %vm216, %v214, %v211
      %v218 = vadd.f32 %v196, 1.0
      %v219 = vlog2.pop %v218
      %v220 = vmul.f32 %v219, 0.6931472
      %v221 = vmul.f32 -0.5, %v196
      %v222 = vadd.f32 %v221, 1.0
      %v223 = vmul.f32 %v222, %v196
      %v224 = vand.u32 2147483647, %v196
      %vm225 = vcmp.lt.f32.partialorder %v224, 0.0004427343
      %v226 = vsel %vm225, %v223, %v220
      %v227 = vadd.f32 %v198, 1.0
      %v228 = vlog2.pop %v227
      %v229 = vmul.f32 %v228, 0.6931472
      %v230 = vmul.f32 -0.5, %v198
      %v231 = vadd.f32 %v230, 1.0
      %v232 = vmul.f32 %v231, %v198
      %v233 = vand.u32 2147483647, %v198
      %vm234 = vcmp.lt.f32.partialorder %v233, 0.0004427343
      %v235 = vsel %vm234, %v232, %v229
      %v236 = vadd.f32 %v200, 1.0
      %v237 = vlog2.pop %v236
      %v238 = vmul.f32 %v237, 0.6931472
      %v239 = vmul.f32 -0.5, %v200
      %v240 = vadd.f32 %v239, 1.0
      %v241 = vmul.f32 %v240, %v200
      %v242 = vand.u32 2147483647, %v200
      %vm243 = vcmp.lt.f32.partialorder %v242, 0.0004427343
      %v244 = vsel %vm243, %v241, %v238
      %v245 = vadd.f32 %v202, 1.0
      %v246 = vlog2.pop %v245
      %v247 = vmul.f32 %v246, 0.6931472
      %v248 = vmul.f32 -0.5, %v202
      %v249 = vadd.f32 %v248, 1.0
      %v250 = vmul.f32 %v249, %v202
      %v251 = vand.u32 2147483647, %v202
      %vm252 = vcmp.lt.f32.partialorder %v251, 0.0004427343
      %v253 = vsel %vm252, %v250, %v247
      %v254 = vadd.f32 %v204, 1.0
      %v255 = vlog2.pop %v254
      %v256 = vmul.f32 %v255, 0.6931472
      %v257 = vmul.f32 -0.5, %v204
      %v258 = vadd.f32 %v257, 1.0
      %v259 = vmul.f32 %v258, %v204
      %v260 = vand.u32 2147483647, %v204
      %vm261 = vcmp.lt.f32.partialorder %v260, 0.0004427343
      %v262 = vsel %vm261, %v259, %v256
      %v263 = vadd.f32 %v206, 1.0
      %v264 = vlog2.pop %v263
      %v265 = vmul.f32 %v264, 0.6931472
      %v266 = vmul.f32 -0.5, %v206
      %v267 = vadd.f32 %v266, 1.0
      %v268 = vmul.f32 %v267, %v206
      %v269 = vand.u32 2147483647, %v206
      %vm270 = vcmp.lt.f32.partialorder %v269, 0.0004427343
      %v271 = vsel %vm270, %v268, %v265
      %v272 = vadd.f32 %v208, 1.0
      %v273 = vlog2.pop %v272
      %v274 = vmul.f32 %v273, 0.6931472
      %v275 = vmul.f32 -0.5, %v208
      %v276 = vadd.f32 %v275, 1.0
      %v277 = vmul.f32 %v276, %v208
      %v278 = vand.u32 2147483647, %v208
      %vm279 = vcmp.lt.f32.partialorder %v278, 0.0004427343
      %v280 = vsel %vm279, %v277, %v274
      %v281 = vsel %vm177, %v144, %v217
      %v282 = vsel %vm178, %v145, %v226
      %v283 = vsel %vm179, %v146, %v235
      %v284 = vsel %vm180, %v147, %v244
      %v285 = vsel %vm181, %v148, %v253
      %v286 = vsel %vm182, %v149, %v262
      %v287 = vsel %vm183, %v150, %v271
      %v288 = vsel %vm184, %v151, %v280
      %v289 = vadd.f32 %v169, %v281
      %v290 = vadd.f32 %v170, %v282
      %v291 = vadd.f32 %v171, %v283
      %v292 = vadd.f32 %v172, %v284
      %v293 = vadd.f32 %v173, %v285
      %v294 = vadd.f32 %v174, %v286
      %v295 = vadd.f32 %v175, %v287
      %v296 = vadd.f32 %v176, %v288
      %v297 = vld [vmem:[#allocation2] sm:$0xff]
      %v306 = vrot.slane %v289, 1
      %v307 = vrot.slane %v290, 1
      %v308 = vrot.slane %v291, 1
      %v309 = vrot.slane %v292, 1
      %v310 = vrot.slane %v293, 1
      %v311 = vrot.slane %v294, 1
      %v312 = vrot.slane %v295, 1
      %v313 = vrot.slane %v296, 1
      %v314 = vrot.slane %v289, 2
      %v315 = vrot.slane %v290, 2
      %v316 = vrot.slane %v291, 2
      %v317 = vrot.slane %v292, 2
      %v318 = vrot.slane %v293, 2
      %v319 = vrot.slane %v294, 2
      %v320 = vrot.slane %v295, 2
      %v321 = vrot.slane %v296, 2
      %v322 = vrot.slane %v289, 3
      %v323 = vrot.slane %v290, 3
      %v324 = vrot.slane %v291, 3
      %v325 = vrot.slane %v292, 3
      %v326 = vrot.slane %v293, 3
      %v327 = vrot.slane %v294, 3
      %v328 = vrot.slane %v295, 3
      %v329 = vrot.slane %v296, 3
      %v330 = vrot.slane %v289, 4
      %v331 = vrot.slane %v290, 4
      %v332 = vrot.slane %v291, 4
      %v333 = vrot.slane %v292, 4
      %v334 = vrot.slane %v293, 4
      %v335 = vrot.slane %v294, 4
      %v336 = vrot.slane %v295, 4
      %v337 = vrot.slane %v296, 4
      %v338 = vrot.slane %v289, 5
      %v339 = vrot.slane %v290, 5
      %v340 = vrot.slane %v291, 5
      %v341 = vrot.slane %v292, 5
      %v342 = vrot.slane %v293, 5
      %v343 = vrot.slane %v294, 5
      %v344 = vrot.slane %v295, 5
      %v345 = vrot.slane %v296, 5
      %v346 = vrot.slane %v289, 6
      %v347 = vrot.slane %v290, 6
      %v348 = vrot.slane %v291, 6
      %v349 = vrot.slane %v292, 6
      %v350 = vrot.slane %v293, 6
      %v351 = vrot.slane %v294, 6
      %v352 = vrot.slane %v295, 6
      %v353 = vrot.slane %v296, 6
      %v354 = vrot.slane %v289, 7
      %v355 = vrot.slane %v290, 7
      %v356 = vrot.slane %v291, 7
      %v357 = vrot.slane %v292, 7
      %v358 = vrot.slane %v293, 7
      %v359 = vrot.slane %v294, 7
      %v360 = vrot.slane %v295, 7
      %v361 = vrot.slane %v296, 7
      %362 = vst [vmem:[#allocation1] ss:$9 sm:$0xff] %v289
      %s363 = scalar_lea.vmem [#allocation1], 1
      %364 = vst [vmem:[%s363] ss:$9 sm:$0xff] %v306
      %s365 = scalar_lea.vmem [#allocation1], 2
      %366 = vst [vmem:[%s365] ss:$9 sm:$0xff] %v314
      %s367 = scalar_lea.vmem [#allocation1], 3
      %368 = vst [vmem:[%s367] ss:$9 sm:$0xff] %v322
      %s369 = scalar_lea.vmem [#allocation1], 4
      %370 = vst [vmem:[%s369] ss:$9 sm:$0xff] %v330
      %s371 = scalar_lea.vmem [#allocation1], 5
      %372 = vst [vmem:[%s371] ss:$9 sm:$0xff] %v338
      %s373 = scalar_lea.vmem [#allocation1], 6
      %374 = vst [vmem:[%s373] ss:$9 sm:$0xff] %v346
      %s375 = scalar_lea.vmem [#allocation1], 7
      %376 = vst [vmem:[%s375] ss:$9 sm:$0xff] %v354
      %v377 = vld [vmem:[#allocation1] sm:$0xff]
      %378 = vst [vmem:[#allocation1] ss:$9 sm:$0xff] %v290
      %379 = vst [vmem:[%s363] ss:$9 sm:$0xff] %v307
      %380 = vst [vmem:[%s365] ss:$9 sm:$0xff] %v315
      %381 = vst [vmem:[%s367] ss:$9 sm:$0xff] %v323
      %382 = vst [vmem:[%s369] ss:$9 sm:$0xff] %v331
      %383 = vst [vmem:[%s371] ss:$9 sm:$0xff] %v339
      %384 = vst [vmem:[%s373] ss:$9 sm:$0xff] %v347
      %385 = vst [vmem:[%s375] ss:$9 sm:$0xff] %v355
      %v386 = vld [vmem:[#allocation1] sm:$0xff]
      %387 = vst [vmem:[#allocation1] ss:$9 sm:$0xff] %v291
      %388 = vst [vmem:[%s363] ss:$9 sm:$0xff] %v308
      %389 = vst [vmem:[%s365] ss:$9 sm:$0xff] %v316
      %390 = vst [vmem:[%s367] ss:$9 sm:$0xff] %v324
      %391 = vst [vmem:[%s369] ss:$9 sm:$0xff] %v332
      %392 = vst [vmem:[%s371] ss:$9 sm:$0xff] %v340
      %393 = vst [vmem:[%s373] ss:$9 sm:$0xff] %v348
      %394 = vst [vmem:[%s375] ss:$9 sm:$0xff] %v356
      %v395 = vld [vmem:[#allocation1] sm:$0xff]
      %396 = vst [vmem:[#allocation1] ss:$9 sm:$0xff] %v292
      %397 = vst [vmem:[%s363] ss:$9 sm:$0xff] %v309
      %398 = vst [vmem:[%s365] ss:$9 sm:$0xff] %v317
      %399 = vst [vmem:[%s367] ss:$9 sm:$0xff] %v325
      %400 = vst [vmem:[%s369] ss:$9 sm:$0xff] %v333
      %401 = vst [vmem:[%s371] ss:$9 sm:$0xff] %v341
      %402 = vst [vmem:[%s373] ss:$9 sm:$0xff] %v349
      %403 = vst [vmem:[%s375] ss:$9 sm:$0xff] %v357
      %v404 = vld [vmem:[#allocation1] sm:$0xff]
      %405 = vst [vmem:[#allocation1] ss:$9 sm:$0xff] %v293
      %406 = vst [vmem:[%s363] ss:$9 sm:$0xff] %v310
      %407 = vst [vmem:[%s365] ss:$9 sm:$0xff] %v318
      %408 = vst [vmem:[%s367] ss:$9 sm:$0xff] %v326
      %409 = vst [vmem:[%s369] ss:$9 sm:$0xff] %v334
      %410 = vst [vmem:[%s371] ss:$9 sm:$0xff] %v342
      %411 = vst [vmem:[%s373] ss:$9 sm:$0xff] %v350
      %412 = vst [vmem:[%s375] ss:$9 sm:$0xff] %v358
      %v413 = vld [vmem:[#allocation1] sm:$0xff]
      %414 = vst [vmem:[#allocation1] ss:$9 sm:$0xff] %v294
      %415 = vst [vmem:[%s363] ss:$9 sm:$0xff] %v311
      %416 = vst [vmem:[%s365] ss:$9 sm:$0xff] %v319
      %417 = vst [vmem:[%s367] ss:$9 sm:$0xff] %v327
      %418 = vst [vmem:[%s369] ss:$9 sm:$0xff] %v335
      %419 = vst [vmem:[%s371] ss:$9 sm:$0xff] %v343
      %420 = vst [vmem:[%s373] ss:$9 sm:$0xff] %v351
      %421 = vst [vmem:[%s375] ss:$9 sm:$0xff] %v359
      %v422 = vld [vmem:[#allocation1] sm:$0xff]
      %423 = vst [vmem:[#allocation1] ss:$9 sm:$0xff] %v295
      %424 = vst [vmem:[%s363] ss:$9 sm:$0xff] %v312
      %425 = vst [vmem:[%s365] ss:$9 sm:$0xff] %v320
      %426 = vst [vmem:[%s367] ss:$9 sm:$0xff] %v328
      %427 = vst [vmem:[%s369] ss:$9 sm:$0xff] %v336
      %428 = vst [vmem:[%s371] ss:$9 sm:$0xff] %v344
      %429 = vst [vmem:[%s373] ss:$9 sm:$0xff] %v352
      %430 = vst [vmem:[%s375] ss:$9 sm:$0xff] %v360
      %v431 = vld [vmem:[#allocation1] sm:$0xff]
      %432 = vst [vmem:[#allocation1] ss:$9 sm:$0xff] %v296
      %433 = vst [vmem:[%s363] ss:$9 sm:$0xff] %v313
      %434 = vst [vmem:[%s365] ss:$9 sm:$0xff] %v321
      %435 = vst [vmem:[%s367] ss:$9 sm:$0xff] %v329
      %436 = vst [vmem:[%s369] ss:$9 sm:$0xff] %v337
      %437 = vst [vmem:[%s371] ss:$9 sm:$0xff] %v345
      %438 = vst [vmem:[%s373] ss:$9 sm:$0xff] %v353
      %439 = vst [vmem:[%s375] ss:$9 sm:$0xff] %v361
      %v440 = vld [vmem:[#allocation1] sm:$0xff]
      %v449 = vrot.slane %v377, 4
      %v450 = vadd.f32 %v377, %v449
      %v451 = vrot.slane %v450, 2
      %v452 = vadd.f32 %v450, %v451
      %v453 = vrot.slane %v452, 1
      %v454 = vadd.f32 %v452, %v453
      %v455 = vrot.slane %v386, 4
      %v456 = vadd.f32 %v386, %v455
      %v457 = vrot.slane %v456, 2
      %v458 = vadd.f32 %v456, %v457
      %v459 = vrot.slane %v458, 1
      %v460 = vadd.f32 %v458, %v459
      %v461 = vrot.slane %v395, 4
      %v462 = vadd.f32 %v395, %v461
      %v463 = vrot.slane %v462, 2
      %v464 = vadd.f32 %v462, %v463
      %v465 = vrot.slane %v464, 1
      %v466 = vadd.f32 %v464, %v465
      %v467 = vrot.slane %v404, 4
      %v468 = vadd.f32 %v404, %v467
      %v469 = vrot.slane %v468, 2
      %v470 = vadd.f32 %v468, %v469
      %v471 = vrot.slane %v470, 1
      %v472 = vadd.f32 %v470, %v471
      %v473 = vrot.slane %v413, 4
      %v474 = vadd.f32 %v413, %v473
      %v475 = vrot.slane %v474, 2
      %v476 = vadd.f32 %v474, %v475
      %v477 = vrot.slane %v476, 1
      %v478 = vadd.f32 %v476, %v477
      %v479 = vrot.slane %v422, 4
      %v480 = vadd.f32 %v422, %v479
      %v481 = vrot.slane %v480, 2
      %v482 = vadd.f32 %v480, %v481
      %v483 = vrot.slane %v482, 1
      %v484 = vadd.f32 %v482, %v483
      %v485 = vrot.slane %v431, 4
      %v486 = vadd.f32 %v431, %v485
      %v487 = vrot.slane %v486, 2
      %v488 = vadd.f32 %v486, %v487
      %v489 = vrot.slane %v488, 1
      %v490 = vadd.f32 %v488, %v489
      %v491 = vrot.slane %v440, 4
      %v492 = vadd.f32 %v440, %v491
      %v493 = vrot.slane %v492, 2
      %v494 = vadd.f32 %v492, %v493
      %v495 = vrot.slane %v494, 1
      %v496 = vadd.f32 %v494, %v495
      %vm505 = vcmask 1041409
      %v506 = vsel %vm505, %v460, %v454
      %vm507 = vcmask 1042434
      %v508 = vsel %vm507, %v466, %v506
      %vm509 = vcmask 1043459
      %v510 = vsel %vm509, %v472, %v508
      %vm511 = vcmask 1044484
      %v512 = vsel %vm511, %v478, %v510
      %vm513 = vcmask 1045509
      %v514 = vsel %vm513, %v484, %v512
      %vm515 = vcmask 1046534
      %v516 = vsel %vm515, %v490, %v514
      %vm517 = vcmask 1047559
      %v518 = vsel %vm517, %v496, %v516
      %v520 = vadd.f32 %v297, %v518
      %521 = vst [vmem:[#allocation2] sm:$0xff] %v520
    $region33: #{tpu_custom_call.1} parent=1 // pred_fallthru
      _
    %p522 = scmp.gt.s32.totalorder %s120, 1
    // Predicated region
    $region34: #{tpu_custom_call.1} parent=1 // pred_check
      %p523 = pneg %p522
    $region35: #{tpu_custom_call.1} parent=1 // pred_check_branch
      %525 = sbr.rel (%p523) target = $region37
    $region36: #{tpu_custom_call.1} parent=1 // pred_region
      %s526 = smul.u32 0, 8
      %s527 = scalar_lea.vmem [#allocation3], %s526
      %v528 = vld [vmem:[%s527] sm:$0xff]
      %v529 = vld [vmem:[%s527 + $0x8] sm:$0xff]
      %v530 = vld [vmem:[%s527 + $0x10] sm:$0xff]
      %v531 = vld [vmem:[%s527 + $0x18] sm:$0xff]
      %v532 = vld [vmem:[%s527 + $0x20] sm:$0xff]
      %v533 = vld [vmem:[%s527 + $0x28] sm:$0xff]
      %v534 = vld [vmem:[%s527 + $0x30] sm:$0xff]
      %v535 = vld [vmem:[%s527 + $0x38] sm:$0xff]
      %s536 = scalar_lea.vmem [#allocation6], %s526
      %v537 = vld [vmem:[%s536] sm:$0xff]
      %v538 = vld [vmem:[%s536 + $0x8] sm:$0xff]
      %v539 = vld [vmem:[%s536 + $0x10] sm:$0xff]
      %v540 = vld [vmem:[%s536 + $0x18] sm:$0xff]
      %v541 = vld [vmem:[%s536 + $0x20] sm:$0xff]
      %v542 = vld [vmem:[%s536 + $0x28] sm:$0xff]
      %v543 = vld [vmem:[%s536 + $0x30] sm:$0xff]
      %v544 = vld [vmem:[%s536 + $0x38] sm:$0xff]
      %v545 = vsub.f32 %v528, %v537
      %v546 = vsub.f32 %v529, %v538
      %v547 = vsub.f32 %v530, %v539
      %v548 = vsub.f32 %v531, %v540
      %v549 = vsub.f32 %v532, %v541
      %v550 = vsub.f32 %v533, %v542
      %v551 = vsub.f32 %v534, %v543
      %v552 = vsub.f32 %v535, %v544
      %s553 = scalar_lea.vmem [#allocation8], %s526
      %v554 = vld [vmem:[%s553] sm:$0xff]
      %v555 = vld [vmem:[%s553 + $0x8] sm:$0xff]
      %v556 = vld [vmem:[%s553 + $0x10] sm:$0xff]
      %v557 = vld [vmem:[%s553 + $0x18] sm:$0xff]
      %v558 = vld [vmem:[%s553 + $0x20] sm:$0xff]
      %v559 = vld [vmem:[%s553 + $0x28] sm:$0xff]
      %v560 = vld [vmem:[%s553 + $0x30] sm:$0xff]
      %v561 = vld [vmem:[%s553 + $0x38] sm:$0xff]
      %v562 = vsub.f32 0.0, %v554
      %v563 = vsub.f32 0.0, %v555
      %v564 = vsub.f32 0.0, %v556
      %v565 = vsub.f32 0.0, %v557
      %v566 = vsub.f32 0.0, %v558
      %v567 = vsub.f32 0.0, %v559
      %v568 = vsub.f32 0.0, %v560
      %v569 = vsub.f32 0.0, %v561
      %v570 = vmul.f32 %v562, %v545
      %v571 = vmul.f32 %v563, %v546
      %v572 = vmul.f32 %v564, %v547
      %v573 = vmul.f32 %v565, %v548
      %v574 = vmul.f32 %v566, %v549
      %v575 = vmul.f32 %v567, %v550
      %v576 = vmul.f32 %v568, %v551
      %v577 = vmul.f32 %v569, %v552
      %vm578 = vcmp.gt.f32.partialorder %v545, 20.0
      %vm579 = vcmp.gt.f32.partialorder %v546, 20.0
      %vm580 = vcmp.gt.f32.partialorder %v547, 20.0
      %vm581 = vcmp.gt.f32.partialorder %v548, 20.0
      %vm582 = vcmp.gt.f32.partialorder %v549, 20.0
      %vm583 = vcmp.gt.f32.partialorder %v550, 20.0
      %vm584 = vcmp.gt.f32.partialorder %v551, 20.0
      %vm585 = vcmp.gt.f32.partialorder %v552, 20.0
      %v586 = vmin.f32 %v545, 20.0
      %v587 = vmin.f32 %v546, 20.0
      %v588 = vmin.f32 %v547, 20.0
      %v589 = vmin.f32 %v548, 20.0
      %v590 = vmin.f32 %v549, 20.0
      %v591 = vmin.f32 %v550, 20.0
      %v592 = vmin.f32 %v551, 20.0
      %v593 = vmin.f32 %v552, 20.0
      %v594 = vmul.f32 %v586, 1.442695
      %v595 = vpow.pop %v594
      %v596 = vmul.f32 %v587, 1.442695
      %v597 = vpow.pop %v596
      %v598 = vmul.f32 %v588, 1.442695
      %v599 = vpow.pop %v598
      %v600 = vmul.f32 %v589, 1.442695
      %v601 = vpow.pop %v600
      %v602 = vmul.f32 %v590, 1.442695
      %v603 = vpow.pop %v602
      %v604 = vmul.f32 %v591, 1.442695
      %v605 = vpow.pop %v604
      %v606 = vmul.f32 %v592, 1.442695
      %v607 = vpow.pop %v606
      %v608 = vmul.f32 %v593, 1.442695
      %v609 = vpow.pop %v608
      %v610 = vadd.f32 %v595, 1.0
      %v611 = vlog2.pop %v610
      %v612 = vmul.f32 %v611, 0.6931472
      %v613 = vmul.f32 -0.5, %v595
      %v614 = vadd.f32 %v613, 1.0
      %v615 = vmul.f32 %v614, %v595
      %v616 = vand.u32 2147483647, %v595
      %vm617 = vcmp.lt.f32.partialorder %v616, 0.0004427343
      %v618 = vsel %vm617, %v615, %v612
      %v619 = vadd.f32 %v597, 1.0
      %v620 = vlog2.pop %v619
      %v621 = vmul.f32 %v620, 0.6931472
      %v622 = vmul.f32 -0.5, %v597
      %v623 = vadd.f32 %v622, 1.0
      %v624 = vmul.f32 %v623, %v597
      %v625 = vand.u32 2147483647, %v597
      %vm626 = vcmp.lt.f32.partialorder %v625, 0.0004427343
      %v627 = vsel %vm626, %v624, %v621
      %v628 = vadd.f32 %v599, 1.0
      %v629 = vlog2.pop %v628
      %v630 = vmul.f32 %v629, 0.6931472
      %v631 = vmul.f32 -0.5, %v599
      %v632 = vadd.f32 %v631, 1.0
      %v633 = vmul.f32 %v632, %v599
      %v634 = vand.u32 2147483647, %v599
      %vm635 = vcmp.lt.f32.partialorder %v634, 0.0004427343
      %v636 = vsel %vm635, %v633, %v630
      %v637 = vadd.f32 %v601, 1.0
      %v638 = vlog2.pop %v637
      %v639 = vmul.f32 %v638, 0.6931472
      %v640 = vmul.f32 -0.5, %v601
      %v641 = vadd.f32 %v640, 1.0
      %v642 = vmul.f32 %v641, %v601
      %v643 = vand.u32 2147483647, %v601
      %vm644 = vcmp.lt.f32.partialorder %v643, 0.0004427343
      %v645 = vsel %vm644, %v642, %v639
      %v646 = vadd.f32 %v603, 1.0
      %v647 = vlog2.pop %v646
      %v648 = vmul.f32 %v647, 0.6931472
      %v649 = vmul.f32 -0.5, %v603
      %v650 = vadd.f32 %v649, 1.0
      %v651 = vmul.f32 %v650, %v603
      %v652 = vand.u32 2147483647, %v603
      %vm653 = vcmp.lt.f32.partialorder %v652, 0.0004427343
      %v654 = vsel %vm653, %v651, %v648
      %v655 = vadd.f32 %v605, 1.0
      %v656 = vlog2.pop %v655
      %v657 = vmul.f32 %v656, 0.6931472
      %v658 = vmul.f32 -0.5, %v605
      %v659 = vadd.f32 %v658, 1.0
      %v660 = vmul.f32 %v659, %v605
      %v661 = vand.u32 2147483647, %v605
      %vm662 = vcmp.lt.f32.partialorder %v661, 0.0004427343
      %v663 = vsel %vm662, %v660, %v657
      %v664 = vadd.f32 %v607, 1.0
      %v665 = vlog2.pop %v664
      %v666 = vmul.f32 %v665, 0.6931472
      %v667 = vmul.f32 -0.5, %v607
      %v668 = vadd.f32 %v667, 1.0
      %v669 = vmul.f32 %v668, %v607
      %v670 = vand.u32 2147483647, %v607
      %vm671 = vcmp.lt.f32.partialorder %v670, 0.0004427343
      %v672 = vsel %vm671, %v669, %v666
      %v673 = vadd.f32 %v609, 1.0
      %v674 = vlog2.pop %v673
      %v675 = vmul.f32 %v674, 0.6931472
      %v676 = vmul.f32 -0.5, %v609
      %v677 = vadd.f32 %v676, 1.0
      %v678 = vmul.f32 %v677, %v609
      %v679 = vand.u32 2147483647, %v609
      %vm680 = vcmp.lt.f32.partialorder %v679, 0.0004427343
      %v681 = vsel %vm680, %v678, %v675
      %v682 = vsel %vm578, %v545, %v618
      %v683 = vsel %vm579, %v546, %v627
      %v684 = vsel %vm580, %v547, %v636
      %v685 = vsel %vm581, %v548, %v645
      %v686 = vsel %vm582, %v549, %v654
      %v687 = vsel %vm583, %v550, %v663
      %v688 = vsel %vm584, %v551, %v672
      %v689 = vsel %vm585, %v552, %v681
      %v690 = vadd.f32 %v570, %v682
      %v691 = vadd.f32 %v571, %v683
      %v692 = vadd.f32 %v572, %v684
      %v693 = vadd.f32 %v573, %v685
      %v694 = vadd.f32 %v574, %v686
      %v695 = vadd.f32 %v575, %v687
      %v696 = vadd.f32 %v576, %v688
      %v697 = vadd.f32 %v577, %v689
      %s698 = sadd.s32 %s119, 0
      %v699 = vlaneseq
      %v700 = vshrl.u32 %v699, 7
      %v701 = vstv %s698
      %v702 = vadd.s32 %v701, %v700
      %vm703 = vcmp.lt.s32.totalorder %v702, 1
      %712 = vst [vmem:[#allocation1] ss:$9 sm:$0xff] %v690
      %s713 = scalar_lea.vmem [#allocation1], 1
      %714 = vst [vmem:[%s713] ss:$9 sm:$0xff] %v691
      %s715 = scalar_lea.vmem [#allocation1], 2
      %716 = vst [vmem:[%s715] ss:$9 sm:$0xff] %v692
      %s717 = scalar_lea.vmem [#allocation1], 3
      %718 = vst [vmem:[%s717] ss:$9 sm:$0xff] %v693
      %s719 = scalar_lea.vmem [#allocation1], 4
      %720 = vst [vmem:[%s719] ss:$9 sm:$0xff] %v694
      %s721 = scalar_lea.vmem [#allocation1], 5
      %722 = vst [vmem:[%s721] ss:$9 sm:$0xff] %v695
      %s723 = scalar_lea.vmem [#allocation1], 6
      %724 = vst [vmem:[%s723] ss:$9 sm:$0xff] %v696
      %s725 = scalar_lea.vmem [#allocation1], 7
      %726 = vst [vmem:[%s725] ss:$9 sm:$0xff] %v697
      %v727 = vld [vmem:[#allocation1] sm:$0xff]
      %v728 = vld [vmem:[#allocation1 + $0x9] sm:$0xff]
      %v729 = vld [vmem:[#allocation1 + $0x12] sm:$0xff]
      %v730 = vld [vmem:[#allocation1 + $0x1b] sm:$0xff]
      %v731 = vld [vmem:[#allocation1 + $0x24] sm:$0xff]
      %v732 = vld [vmem:[#allocation1 + $0x2d] sm:$0xff]
      %v733 = vld [vmem:[#allocation1 + $0x36] sm:$0xff]
      %v734 = vld [vmem:[#allocation1 + $0x3f] sm:$0xff]
      %v743 = vsel %vm703, %v727, 0.0
      %v744 = vsel %vm703, %v728, 0.0
      %v745 = vsel %vm703, %v729, 0.0
      %v746 = vsel %vm703, %v730, 0.0
      %v747 = vsel %vm703, %v731, 0.0
      %v748 = vsel %vm703, %v732, 0.0
      %v749 = vsel %vm703, %v733, 0.0
      %v750 = vsel %vm703, %v734, 0.0
      %v751 = vld [vmem:[#allocation2] sm:$0xff]
      %v752 = vrot.slane %v745, 4
      %vm753 = vcmask 1047556
      %v754 = vsel %vm753, %v752, %v743
      %v755 = vrot.slane %v743, 4
      %v756 = vsel %vm753, %v745, %v755
      %v758 = vunpack.c.l.s4 1983009808
      %v759 = vunpack.c.0.s8 %v758
      %v760 = vperm.slane %v754, %v759
      %v762 = vunpack.c.l.s4 1983009808
      %v763 = vunpack.c.0.s8 %v762
      %v764 = vperm.slane %v756, %v763
      %v765 = vrot.slane %v746, 4
      %v766 = vsel %vm753, %v765, %v744
      %v767 = vrot.slane %v744, 4
      %v768 = vsel %vm753, %v746, %v767
      %v770 = vunpack.c.l.s4 1983009808
      %v771 = vunpack.c.0.s8 %v770
      %v772 = vperm.slane %v766, %v771
      %v774 = vunpack.c.l.s4 1983009808
      %v775 = vunpack.c.0.s8 %v774
      %v776 = vperm.slane %v768, %v775
      %v777 = vrot.slane %v749, 4
      %v778 = vsel %vm753, %v777, %v747
      %v779 = vrot.slane %v747, 4
      %v780 = vsel %vm753, %v749, %v779
      %v782 = vunpack.c.l.s4 1983009808
      %v783 = vunpack.c.0.s8 %v782
      %v784 = vperm.slane %v778, %v783
      %v786 = vunpack.c.l.s4 1983009808
      %v787 = vunpack.c.0.s8 %v786
      %v788 = vperm.slane %v780, %v787
      %v789 = vrot.slane %v750, 4
      %v790 = vsel %vm753, %v789, %v748
      %v791 = vrot.slane %v748, 4
      %v792 = vsel %vm753, %v750, %v791
      %v794 = vunpack.c.l.s4 1983009808
      %v795 = vunpack.c.0.s8 %v794
      %v796 = vperm.slane %v790, %v795
      %v798 = vunpack.c.l.s4 1983009808
      %v799 = vunpack.c.0.s8 %v798
      %v800 = vperm.slane %v792, %v799
      %v801 = vrot.slane %v772, 4
      %v802 = vsel %vm753, %v801, %v760
      %v803 = vrot.slane %v760, 4
      %v804 = vsel %vm753, %v772, %v803
      %v806 = vunpack.c.l.s4 1934713408
      %v807 = vunpack.c.0.s8 %v806
      %v808 = vperm.slane %v802, %v807
      %v810 = vunpack.c.l.s4 1934713408
      %v811 = vunpack.c.0.s8 %v810
      %v812 = vperm.slane %v804, %v811
      %v813 = vrot.slane %v776, 4
      %v814 = vsel %vm753, %v813, %v764
      %v815 = vrot.slane %v764, 4
      %v816 = vsel %vm753, %v776, %v815
      %v818 = vunpack.c.l.s4 1934713408
      %v819 = vunpack.c.0.s8 %v818
      %v820 = vperm.slane %v814, %v819
      %v822 = vunpack.c.l.s4 1934713408
      %v823 = vunpack.c.0.s8 %v822
      %v824 = vperm.slane %v816, %v823
      %v825 = vrot.slane %v796, 4
      %v826 = vsel %vm753, %v825, %v784
      %v827 = vrot.slane %v784, 4
      %v828 = vsel %vm753, %v796, %v827
      %v830 = vunpack.c.l.s4 1934713408
      %v831 = vunpack.c.0.s8 %v830
      %v832 = vperm.slane %v826, %v831
      %v834 = vunpack.c.l.s4 1934713408
      %v835 = vunpack.c.0.s8 %v834
      %v836 = vperm.slane %v828, %v835
      %v837 = vrot.slane %v800, 4
      %v838 = vsel %vm753, %v837, %v788
      %v839 = vrot.slane %v788, 4
      %v840 = vsel %vm753, %v800, %v839
      %v842 = vunpack.c.l.s4 1934713408
      %v843 = vunpack.c.0.s8 %v842
      %v844 = vperm.slane %v838, %v843
      %v846 = vunpack.c.l.s4 1934713408
      %v847 = vunpack.c.0.s8 %v846
      %v848 = vperm.slane %v840, %v847
      %v849 = vrot.slane %v832, 4
      %v850 = vsel %vm753, %v849, %v808
      %v851 = vrot.slane %v808, 4
      %v852 = vsel %vm753, %v832, %v851
      %v853 = vrot.slane %v836, 4
      %v854 = vsel %vm753, %v853, %v812
      %v855 = vrot.slane %v812, 4
      %v856 = vsel %vm753, %v836, %v855
      %v857 = vrot.slane %v844, 4
      %v858 = vsel %vm753, %v857, %v820
      %v859 = vrot.slane %v820, 4
      %v860 = vsel %vm753, %v844, %v859
      %v861 = vrot.slane %v848, 4
      %v862 = vsel %vm753, %v861, %v824
      %v863 = vrot.slane %v824, 4
      %v864 = vsel %vm753, %v848, %v863
      %v865 = vrot.slane %v850, 4
      %v866 = vadd.f32 %v850, %v865
      %v867 = vrot.slane %v866, 2
      %v868 = vadd.f32 %v866, %v867
      %v869 = vrot.slane %v868, 1
      %v870 = vadd.f32 %v868, %v869
      %v871 = vrot.slane %v852, 4
      %v872 = vadd.f32 %v852, %v871
      %v873 = vrot.slane %v872, 2
      %v874 = vadd.f32 %v872, %v873
      %v875 = vrot.slane %v874, 1
      %v876 = vadd.f32 %v874, %v875
      %v877 = vrot.slane %v854, 4
      %v878 = vadd.f32 %v854, %v877
      %v879 = vrot.slane %v878, 2
      %v880 = vadd.f32 %v878, %v879
      %v881 = vrot.slane %v880, 1
      %v882 = vadd.f32 %v880, %v881
      %v883 = vrot.slane %v856, 4
      %v884 = vadd.f32 %v856, %v883
      %v885 = vrot.slane %v884, 2
      %v886 = vadd.f32 %v884, %v885
      %v887 = vrot.slane %v886, 1
      %v888 = vadd.f32 %v886, %v887
      %v889 = vrot.slane %v858, 4
      %v890 = vadd.f32 %v858, %v889
      %v891 = vrot.slane %v890, 2
      %v892 = vadd.f32 %v890, %v891
      %v893 = vrot.slane %v892, 1
      %v894 = vadd.f32 %v892, %v893
      %v895 = vrot.slane %v860, 4
      %v896 = vadd.f32 %v860, %v895
      %v897 = vrot.slane %v896, 2
      %v898 = vadd.f32 %v896, %v897
      %v899 = vrot.slane %v898, 1
      %v900 = vadd.f32 %v898, %v899
      %v901 = vrot.slane %v862, 4
      %v902 = vadd.f32 %v862, %v901
      %v903 = vrot.slane %v902, 2
      %v904 = vadd.f32 %v902, %v903
      %v905 = vrot.slane %v904, 1
      %v906 = vadd.f32 %v904, %v905
      %v907 = vrot.slane %v864, 4
      %v908 = vadd.f32 %v864, %v907
      %v909 = vrot.slane %v908, 2
      %v910 = vadd.f32 %v908, %v909
      %v911 = vrot.slane %v910, 1
      %v912 = vadd.f32 %v910, %v911
      %vm921 = vcmask 1041409
      %v922 = vsel %vm921, %v876, %v870
      %vm923 = vcmask 1042434
      %v924 = vsel %vm923, %v882, %v922
      %vm925 = vcmask 1043459
      %v926 = vsel %vm925, %v888, %v924
      %vm927 = vcmask 1044484
      %v928 = vsel %vm927, %v894, %v926
      %vm929 = vcmask 1045509
      %v930 = vsel %vm929, %v900, %v928
      %vm931 = vcmask 1046534
      %v932 = vsel %vm931, %v906, %v930
      %vm933 = vcmask 1047559
      %v934 = vsel %vm933, %v912, %v932
      %v936 = vadd.f32 %v751, %v934
      %937 = vst [vmem:[#allocation2] sm:$0xff] %v936
    $region37: #{tpu_custom_call.1} parent=1 // pred_fallthru
      _
    // Predicated region
    $region38: #{tpu_custom_call.1} parent=1 // pred_check
      %p938 = pneg %p113
    $region39: #{tpu_custom_call.1} parent=1 // pred_check_branch
      %940 = sbr.rel (%p938) target = $region41
    $region40: #{tpu_custom_call.1} parent=1 // pred_region
      %v941 = vld [vmem:[#allocation2] sm:$0xff]
      %942 = vst [vmem:[#allocation9] sm:$0xff] %v941
    $region41: #{tpu_custom_call.1} parent=1 // pred_fallthru
      _
    // Predicated region
    $region42: #{tpu_custom_call.1} parent=1 // pred_check
      _
    $region43: #{tpu_custom_call.1} parent=1 // pred_check_branch
      %944 = sbr.rel (0) target = $region45
    $region44: #{tpu_custom_call.1} parent=1 // pred_region
      %946 = vsyncadd [#allocation5], 0
      %s948 = sshll.u32 [#allocation9], 4
      %s949 = int_to_ptr.vmem [resolvable:$true] %s948
      %s950 = sshll.u32 %s3, 4
      %s951 = int_to_ptr.hbm [resolvable:$true] %s950
      %953 = dma.vmem_to_hbm [thread:$0]  %s949, 128, %s951, [#allocation5]
    $region45: #{tpu_custom_call.1} parent=1 // pred_fallthru
      _
    // Predicated region
    $region46: #{tpu_custom_call.1} parent=1 // pred_check
      _
    $region47: #{tpu_custom_call.1} parent=1 // pred_check_branch
      %955 = sbr.rel (0) target = $region49
    $region48: #{tpu_custom_call.1} parent=1 // pred_region
      %957 = dma.done [#allocation5], 128
    $region49: #{tpu_custom_call.1} parent=1 // pred_fallthru
      _
    %958 = vsyncpa [#allocation4], 1
    %959 = vsyncpa [#allocation7], 1
    %960 = vsyncpa [#allocation5], 1

</llo_original>
